<compile_context>
chip_gen: v7x
topology: tpu7x:2x2x1
jax: 0.10.0
libtpu: 0.0.40
codegen_flags: <defaults>
</compile_context>

<pallas_src>
import functools

import jax
import jax.numpy as jnp
import numpy as np
from jax.experimental import pallas as pl
from jax.experimental.pallas import tpu as pltpu

BN_EPS = 1e-5
LANE = 128


def _round_up(x, m):
    return (x + m - 1) // m * m


def _device_kind():
    try:
        return jax.devices()[0].device_kind.lower()
    except Exception:
        return ""


def _is_v7x():
    return "v7" in _device_kind()


def _default_tm():
    """Row-tile budget: 512 on v5e/v6e (128 MiB VMEM), 256 on v7x (64 MiB)."""
    return 256 if _is_v7x() else 512


def _vmem_budget_bytes():
    """Conservative scoped-VMEM cap: 40 MiB on v7x, 64 MiB on v5e/v6e."""
    return (40 << 20) if _is_v7x() else (64 << 20)


# ----------------------------- Pallas kernels ------------------------------ #
# Weights are fully VMEM-resident (constant index_map), so the K reduction is a
# single in-kernel dot: no scratch accumulator, no pl.when init/finalize.

def _conv_bias_kernel(x_ref, w_ref, bias_ref, o_ref, *, relu):
    """out = relu?( x @ w_scaled + bias )   (BN scale pre-folded into w)."""
    y = jnp.dot(x_ref[...], w_ref[...], preferred_element_type=jnp.float32)
    y = y + bias_ref[...]
    if relu:
        y = jnp.maximum(y, 0.0)
    o_ref[...] = y.astype(o_ref.dtype)


def _conv_bias_add_relu_kernel(x_ref, w_ref, bias_ref, res_ref, o_ref):
    """out = relu( x @ w_scaled + bias + residual )  -- identity shortcut."""
    y = jnp.dot(x_ref[...], w_ref[...], preferred_element_type=jnp.float32)
    y = y + bias_ref[...] + res_ref[...].astype(jnp.float32)
    o_ref[...] = jnp.maximum(y, 0.0).astype(o_ref.dtype)


def _conv_bias_proj_relu_kernel(x_ref, w_ref, bias_ref,
                                xs_ref, wsc_ref, bsc_ref, o_ref):
    """out = relu( x @ w + b + (xs @ wsc + bsc) )  -- fused 1x1 projection."""
    y = jnp.dot(x_ref[...], w_ref[...], preferred_element_type=jnp.float32)
    res = jnp.dot(xs_ref[...], wsc_ref[...], preferred_element_type=jnp.float32)
    y = y + bias_ref[...] + res + bsc_ref[...]
    o_ref[...] = jnp.maximum(y, 0.0).astype(o_ref.dtype)


# --------------------------- fused matmul dispatch -------------------------- #

def _fused_conv_matmul(x2d, w2d_scaled, bias, *, relu=True,
                       out_dtype=jnp.float32, residual=None, shortcut=None):
    """Fused conv-as-matmul (BN scale pre-folded into weights) + bias
    (+ residual / fused 1x1 projection) (+ ReLU).

    x2d:        (M, K) im2col activations.
    w2d_scaled: (K, Cout) f32 weights already multiplied by the BN scale.
    bias:       (Cout,) folded BN bias.
    residual:   (M, Cout) identity-shortcut tensor, OR
    shortcut:   (xs2d (M, Kc), wsc_scaled (Kc, Cout), bias_sc) 1x1 projection.
    Returns (M, Cout) in out_dtype.
    """
    M, K = x2d.shape
    Cout = w2d_scaled.shape[1]

    K_pad = _round_up(K, LANE)       # lane-dense activation loads, minimal waste
    Cout_pad = _round_up(Cout, LANE)  # lane-dense (unmasked) output stores
    out_bytes = np.dtype(out_dtype).itemsize

    # VMEM footprint model (double-buffered pipeline buffers everywhere,
    # conservative for the constant-index weight slab).
    per_row = 2 * K_pad * 2 + 2 * Cout_pad * out_bytes
    fixed = 2 * K_pad * Cout_pad * 2 + 2 * Cout_pad * 4
    if residual is not None:
        per_row += 2 * Cout_pad * 2
    if shortcut is not None:
        Kc = shortcut[0].shape[1]
        per_row += 2 * Kc * 2
        fixed += 2 * (Kc * Cout_pad * 2 + Cout_pad * 4)

    budget = _vmem_budget_bytes()
    tm = min(_default_tm(), _round_up(M, 8))
    if _is_v7x() and M > 8:
        # Make sure both TensorCores get at least one M tile (megacore split).
        tm = min(tm, max(8, _round_up(-(-M // 2), 8)))
    while tm > 8 and fixed + tm * per_row > budget - (8 << 20):
        tm = max(8, _round_up(tm // 2, 8))
    M_pad = _round_up(M, tm)

    # bf16 MXU operands (f32 accumulation); zero-padding keeps padded rows/cols
    # exactly zero so they can be sliced off afterwards.
    xb = jnp.pad(x2d.astype(jnp.bfloat16), ((0, M_pad - M), (0, K_pad - K)))
    wb = jnp.pad(w2d_scaled.astype(jnp.bfloat16),
                 ((0, K_pad - K), (0, Cout_pad - Cout)))
    bi = jnp.pad(bias.reshape(1, Cout).astype(jnp.float32),
                 ((0, 0), (0, Cout_pad - Cout)))

    in_specs = [
        pl.BlockSpec((tm, K_pad), lambda i: (i, 0)),          # activations
        pl.BlockSpec((K_pad, Cout_pad), lambda i: (0, 0)),    # resident weights
        pl.BlockSpec((1, Cout_pad), lambda i: (0, 0)),        # folded BN bias
    ]
    args = [xb, wb, bi]
    flops = 2.0 * M_pad * K_pad * Cout_pad

    if residual is not None:
        rb = jnp.pad(residual.astype(jnp.bfloat16),
                     ((0, M_pad - M), (0, Cout_pad - residual.shape[1])))
        in_specs.append(pl.BlockSpec((tm, Cout_pad), lambda i: (i, 0)))
        args.append(rb)
        kernel = _conv_bias_add_relu_kernel
    elif shortcut is not None:
        xs2d, wsc_scaled, bsc = shortcut
        Kc = xs2d.shape[1]
        xsb = jnp.pad(xs2d.astype(jnp.bfloat16), ((0, M_pad - M), (0, 0)))
        wscb = jnp.pad(wsc_scaled.astype(jnp.bfloat16),
                       ((0, 0), (0, Cout_pad - Cout)))
        bscb = jnp.pad(bsc.reshape(1, Cout).astype(jnp.float32),
                       ((0, 0), (0, Cout_pad - Cout)))
        in_specs += [
            pl.BlockSpec((tm, Kc), lambda i: (i, 0)),
            pl.BlockSpec((Kc, Cout_pad), lambda i: (0, 0)),
            pl.BlockSpec((1, Cout_pad), lambda i: (0, 0)),
        ]
        args += [xsb, wscb, bscb]
        flops += 2.0 * M_pad * Kc * Cout_pad
        kernel = _conv_bias_proj_relu_kernel
    else:
        kernel = functools.partial(_conv_bias_kernel, relu=relu)

    bytes_accessed = (sum(int(np.prod(a.shape)) * a.dtype.itemsize for a in args)
                      + M_pad * Cout_pad * out_bytes)
    cost = pl.CostEstimate(flops=int(flops), transcendentals=0,
                           bytes_accessed=int(bytes_accessed))

    needed = fixed + tm * per_row
    vmem_limit = int(min(max(needed + (8 << 20), 32 << 20), budget))

    out = pl.pallas_call(
        kernel,
        out_shape=jax.ShapeDtypeStruct((M_pad, Cout_pad), out_dtype),
        grid=(M_pad // tm,),
        in_specs=in_specs,
        out_specs=pl.BlockSpec((tm, Cout_pad), lambda i: (i, 0)),
        compiler_params=pltpu.CompilerParams(
            dimension_semantics=("parallel",),
            vmem_limit_bytes=vmem_limit),
        cost_estimate=cost,
    )(*args)
    return out[:M, :Cout]


# ------------------------------ JAX glue code ------------------------------ #

def _im2col(x_nhwc, kh, kw, stride, pad):
    """Extract conv patches (XLA glue): (N,H,W,C) -> ((N*Ho*Wo), kh*kw*C)."""
    N, H, W, C = x_nhwc.shape
    xp = jnp.pad(x_nhwc, ((0, 0), (pad, pad), (pad, pad), (0, 0)))
    Ho = (H + 2 * pad - kh) // stride + 1
    Wo = (W + 2 * pad - kw) // stride + 1
    cols = []
    for i in range(kh):
        for j in range(kw):
            cols.append(xp[:, i:i + stride * Ho:stride, j:j + stride * Wo:stride, :])
    cols = jnp.concatenate(cols, axis=-1)                 # (N, Ho, Wo, kh*kw*C)
    return cols.reshape(N * Ho * Wo, kh * kw * C), (N, Ho, Wo)


def _conv_w_to_matrix(w_oihw):
    """PyTorch OIHW conv weight -> (KH*KW*Cin, Cout) matrix matching im2col order."""
    Cout, Cin, KH, KW = w_oihw.shape
    return jnp.transpose(w_oihw, (2, 3, 1, 0)).reshape(KH * KW * Cin, Cout)


def _fold_bn(bn):
    scale = bn["gamma"] / jnp.sqrt(bn["var"] + BN_EPS)
    bias = bn["beta"] - bn["mean"] * scale
    return scale, bias


def init_basic_block_params(key, in_planes, planes, stride):
    ks = jax.random.split(key, 8)

    def bn_params(k, c):
        k1, k2, k3, k4 = jax.random.split(k, 4)
        return {
            "gamma": 1.0 + 0.1 * jax.random.normal(k1, (c,), jnp.float32),
            "beta": 0.1 * jax.random.normal(k2, (c,), jnp.float32),
            "mean": 0.1 * jax.random.normal(k3, (c,), jnp.float32),
            "var": 0.5 + jnp.abs(jax.random.normal(k4, (c,), jnp.float32)),
        }

    params = {
        "conv1_w": 0.1 * jax.random.normal(ks[0], (planes, in_planes, 3, 3), jnp.float32),
        "bn1": bn_params(ks[1], planes),
        "conv2_w": 0.1 * jax.random.normal(ks[2], (planes, planes, 3, 3), jnp.float32),
        "bn2": bn_params(ks[3], planes),
    }
    if stride != 1 or in_planes != planes:
        params["sc_w"] = 0.1 * jax.random.normal(ks[4], (planes, in_planes, 1, 1), jnp.float32)
        params["sc_bn"] = bn_params(ks[5], planes)
    return params


def basic_block_forward(params, x_nchw, stride):
    """Pallas-backed BasicBlock.forward. Input/output are NCHW (PyTorch convention)."""
    # NCHW -> NHWC once per block (boundary cost; a full network would stay NHWC).
    x = jnp.transpose(x_nchw, (0, 2, 3, 1)).astype(jnp.bfloat16)
    N, H, W, Cin = x.shape
    planes = params["conv1_w"].shape[0]

    # conv1 (3x3, stride) + bn1 + relu; BN scale folded into f32 weights,
    # output emitted directly in bf16 (feeds the conv2 im2col).
    s1, b1 = _fold_bn(params["bn1"])
    w1 = _conv_w_to_matrix(params["conv1_w"]) * s1[None, :]
    cols1, (_, Ho, Wo) = _im2col(x, 3, 3, stride, 1)
    out1 = _fused_conv_matmul(cols1, w1, b1, relu=True, out_dtype=jnp.bfloat16)

    # conv2 (3x3, stride 1) + bn2 + shortcut + relu, all in one kernel.
    s2, b2 = _fold_bn(params["bn2"])
    w2 = _conv_w_to_matrix(params["conv2_w"]) * s2[None, :]
    cols2, _ = _im2col(out1.reshape(N, Ho, Wo, planes), 3, 3, 1, 1)

    if "sc_w" in params:
        # Projection shortcut: fused 1x1-conv + BN inside the conv2 kernel.
        xs = x[:, ::stride, ::stride, :].reshape(N * Ho * Wo, Cin)
        ss, bs = _fold_bn(params["sc_bn"])
        wsc = _conv_w_to_matrix(params["sc_w"]) * ss[None, :]     # (Cin, planes)
        out2 = _fused_conv_matmul(cols2, w2, b2, relu=True, out_dtype=jnp.float32,
                                  shortcut=(xs, wsc, bs))
    else:
        # Identity shortcut (stride==1, in_planes==planes).
        res = x.reshape(N * Ho * Wo, Cin)
        out2 = _fused_conv_matmul(cols2, w2, b2, relu=True, out_dtype=jnp.float32,
                                  residual=res)

    out2 = out2.reshape(N, Ho, Wo, planes)
    return jnp.transpose(out2, (0, 3, 1, 2))  # -> NCHW


# ------------------------------ pure-JAX ref -------------------------------- #

def _ref_forward(params, x_nchw, stride):
    def conv(x, w, s, pad):
        return jax.lax.conv_general_dilated(
            x, w, (s, s), [(pad, pad), (pad, pad)],
            dimension_numbers=("NCHW", "OIHW", "NCHW"))

    def bn(x, p):
        sc = p["gamma"] / jnp.sqrt(p["var"] + BN_EPS)
        bi = p["beta"] - p["mean"] * sc
        return x * sc[None, :, None, None] + bi[None, :, None, None]

    out = jax.nn.relu(bn(conv(x_nchw, params["conv1_w"], stride, 1), params["bn1"]))
    out = bn(conv(out, params["conv2_w"], 1, 1), params["bn2"])
    if "sc_w" in params:
        sc = bn(conv(x_nchw, params["sc_w"], stride, 0), params["sc_bn"])
    else:
        sc = x_nchw
    return jax.nn.relu(out + sc)


# ----------------------------------- main ----------------------------------- #

if __name__ == "__main__":
    key = jax.random.PRNGKey(0)
    kp1, kp2, kx1, kx2 = jax.random.split(key, 4)

    fwd = jax.jit(basic_block_forward, static_argnums=(2,))

    # Case 1: projection-shortcut path (stride=2, channel change): x = (2,4,16,16)
    params_a = init_basic_block_params(kp1, 4, 8, 2)
    xa = jax.random.normal(kx1, (2, 4, 16, 16), jnp.float32)
    out_a = jax.block_until_ready(fwd(params_a, xa, 2))
    ref_a = _ref_forward(params_a, xa, 2)
    assert out_a.shape == ref_a.shape, (out_a.shape, ref_a.shape)
    np.testing.assert_allclose(np.asarray(out_a), np.asarray(ref_a),
                               rtol=2e-2, atol=2e-2)

    # Case 2: identity-shortcut path (stride=1, same channels): x = (2,8,16,16)
    params_b = init_basic_block_params(kp2, 8, 8, 1)
    xb = jax.random.normal(kx2, (2, 8, 16, 16), jnp.float32)
    out_b = jax.block_until_ready(fwd(params_b, xb, 1))
    ref_b = _ref_forward(params_b, xb, 1)
    assert out_b.shape == ref_b.shape, (out_b.shape, ref_b.shape)
    np.testing.assert_allclose(np.asarray(out_b), np.asarray(ref_b),
                               rtol=2e-2, atol=2e-2)

    print("KERNEL_OK")
</pallas_src>

<mosaic_0001>
module attributes {stable_mosaic.version = 11 : i64} {
  func.func @_conv_bias_kernel(%arg0: i32, %arg1: memref<128x128xbf16, #tpu.memory_space<vmem>>, %arg2: memref<128x128xbf16, #tpu.memory_space<vmem>>, %arg3: memref<1x128xf32, #tpu.memory_space<vmem>>, %arg4: memref<128x128xbf16, #tpu.memory_space<vmem>>) attributes {dimension_semantics = [#tpu.dimension_semantics<parallel>], iteration_bounds = array<i64: 1>, scalar_prefetch = 0 : i64, scratch_operands = 0 : i64, tpu.core_type = #tpu.core_type<tc>, window_params = [{transform_indices = @transform_0, window_bounds = array<i64: 128, 128>}, {pipeline_mode = #tpu.pipeline_mode<synchronous>, transform_indices = @transform_1, window_bounds = array<i64: 128, 128>}, {pipeline_mode = #tpu.pipeline_mode<synchronous>, transform_indices = @transform_2, window_bounds = array<i64: 1, 128>}, {transform_indices = @transform_3, window_bounds = array<i64: 128, 128>}]} {
    %c0 = arith.constant 0 : index
    %c0_0 = arith.constant 0 : index
    %0 = vector.load %arg1[%c0, %c0_0] : memref<128x128xbf16, #tpu.memory_space<vmem>>, vector<128x128xbf16>
    %c0_1 = arith.constant 0 : index
    %c0_2 = arith.constant 0 : index
    %1 = vector.load %arg2[%c0_1, %c0_2] : memref<128x128xbf16, #tpu.memory_space<vmem>>, vector<128x128xbf16>
    %cst = arith.constant dense<0.000000e+00> : vector<128x128xf32>
    %2 = tpu.matmul %0, %1, %cst {dimension_numbers = #tpu.dot_dimension_numbers<[1], [0], [0], [1], [0, 0, 1, 1], [], []>} : vector<128x128xbf16>, vector<128x128xbf16>, vector<128x128xf32> -> vector<128x128xf32>
    %c0_3 = arith.constant 0 : index
    %c0_4 = arith.constant 0 : index
    %3 = vector.load %arg3[%c0_3, %c0_4] : memref<1x128xf32, #tpu.memory_space<vmem>>, vector<1x128xf32>
    %4 = vector.broadcast %3 : vector<1x128xf32> to vector<128x128xf32>
    %5 = arith.addf %2, %4 : vector<128x128xf32>
    %cst_5 = arith.constant 0.000000e+00 : f32
    %6 = vector.broadcast %cst_5 : f32 to vector<128x128xf32>
    %7 = arith.maximumf %5, %6 : vector<128x128xf32>
    %8 = arith.truncf %7 : vector<128x128xf32> to vector<128x128xbf16>
    %c0_6 = arith.constant 0 : index
    %c0_7 = arith.constant 0 : index
    %9 = vector.load %arg4[%c0_6, %c0_7] : memref<128x128xbf16, #tpu.memory_space<vmem>>, vector<128x128xbf16>
    tpu.vector_store %arg4[%c0_6, %c0_7], %8 {strides = array<i32>} : memref<128x128xbf16, #tpu.memory_space<vmem>>, vector<128x128xbf16>,
    return
  }
  func.func @transform_0(%arg0: i32) -> (i32, i32) {
    %c0_i32 = arith.constant 0 : i32
    %c0_i32_0 = arith.constant 0 : i32
    return %arg0, %c0_i32 : i32, i32
  }
  func.func @transform_1(%arg0: i32) -> (i32, i32) {
    %c0_i32 = arith.constant 0 : i32
    %c0_i32_0 = arith.constant 0 : i32
    %c0_i32_1 = arith.constant 0 : i32
    return %c0_i32, %c0_i32_0 : i32, i32
  }
  func.func @transform_2(%arg0: i32) -> (i32, i32) {
    %c0_i32 = arith.constant 0 : i32
    %c0_i32_0 = arith.constant 0 : i32
    %c0_i32_1 = arith.constant 0 : i32
    return %c0_i32, %c0_i32_0 : i32, i32
  }
  func.func @transform_3(%arg0: i32) -> (i32, i32) {
    %c0_i32 = arith.constant 0 : i32
    %c0_i32_0 = arith.constant 0 : i32
    return %arg0, %c0_i32 : i32, i32
  }
}

module attributes {stable_mosaic.version = 11 : i64} {
  func.func @_conv_bias_proj_relu_kernel(%arg0: i32, %arg1: memref<128x128xbf16, #tpu.memory_space<vmem>>, %arg2: memref<128x128xbf16, #tpu.memory_space<vmem>>, %arg3: memref<1x128xf32, #tpu.memory_space<vmem>>, %arg4: memref<128x4xbf16, #tpu.memory_space<vmem>>, %arg5: memref<4x128xbf16, #tpu.memory_space<vmem>>, %arg6: memref<1x128xf32, #tpu.memory_space<vmem>>, %arg7: memref<128x128xf32, #tpu.memory_space<vmem>>) attributes {dimension_semantics = [#tpu.dimension_semantics<parallel>], iteration_bounds = array<i64: 1>, scalar_prefetch = 0 : i64, scratch_operands = 0 : i64, tpu.core_type = #tpu.core_type<tc>, window_params = [{transform_indices = @transform_0, window_bounds = array<i64: 128, 128>}, {pipeline_mode = #tpu.pipeline_mode<synchronous>, transform_indices = @transform_1, window_bounds = array<i64: 128, 128>}, {pipeline_mode = #tpu.pipeline_mode<synchronous>, transform_indices = @transform_2, window_bounds = array<i64: 1, 128>}, {transform_indices = @transform_3, window_bounds = array<i64: 128, 4>}, {pipeline_mode = #tpu.pipeline_mode<synchronous>, transform_indices = @transform_4, window_bounds = array<i64: 4, 128>}, {pipeline_mode = #tpu.pipeline_mode<synchronous>, transform_indices = @transform_5, window_bounds = array<i64: 1, 128>}, {transform_indices = @transform_6, window_bounds = array<i64: 128, 128>}]} {
    %c0 = arith.constant 0 : index
    %c0_0 = arith.constant 0 : index
    %0 = vector.load %arg1[%c0, %c0_0] : memref<128x128xbf16, #tpu.memory_space<vmem>>, vector<128x128xbf16>
    %c0_1 = arith.constant 0 : index
    %c0_2 = arith.constant 0 : index
    %1 = vector.load %arg2[%c0_1, %c0_2] : memref<128x128xbf16, #tpu.memory_space<vmem>>, vector<128x128xbf16>
    %cst = arith.constant dense<0.000000e+00> : vector<128x128xf32>
    %2 = tpu.matmul %0, %1, %cst {dimension_numbers = #tpu.dot_dimension_numbers<[1], [0], [0], [1], [0, 0, 1, 1], [], []>} : vector<128x128xbf16>, vector<128x128xbf16>, vector<128x128xf32> -> vector<128x128xf32>
    %c0_3 = arith.constant 0 : index
    %c0_4 = arith.constant 0 : index
    %3 = vector.load %arg4[%c0_3, %c0_4] : memref<128x4xbf16, #tpu.memory_space<vmem>>, vector<128x4xbf16>
    %c0_5 = arith.constant 0 : index
    %c0_6 = arith.constant 0 : index
    %4 = vector.load %arg5[%c0_5, %c0_6] : memref<4x128xbf16, #tpu.memory_space<vmem>>, vector<4x128xbf16>
    %cst_7 = arith.constant dense<0.000000e+00> : vector<128x128xf32>
    %5 = tpu.matmul %3, %4, %cst_7 {dimension_numbers = #tpu.dot_dimension_numbers<[1], [0], [0], [1], [0, 0, 1, 1], [], []>} : vector<128x4xbf16>, vector<4x128xbf16>, vector<128x128xf32> -> vector<128x128xf32>
    %c0_8 = arith.constant 0 : index
    %c0_9 = arith.constant 0 : index
    %6 = vector.load %arg3[%c0_8, %c0_9] : memref<1x128xf32, #tpu.memory_space<vmem>>, vector<1x128xf32>
    %7 = vector.broadcast %6 : vector<1x128xf32> to vector<128x128xf32>
    %8 = arith.addf %2, %7 : vector<128x128xf32>
    %9 = arith.addf %8, %5 : vector<128x128xf32>
    %c0_10 = arith.constant 0 : index
    %c0_11 = arith.constant 0 : index
    %10 = vector.load %arg6[%c0_10, %c0_11] : memref<1x128xf32, #tpu.memory_space<vmem>>, vector<1x128xf32>
    %11 = vector.broadcast %10 : vector<1x128xf32> to vector<128x128xf32>
    %12 = arith.addf %9, %11 : vector<128x128xf32>
    %cst_12 = arith.constant 0.000000e+00 : f32
    %13 = vector.broadcast %cst_12 : f32 to vector<128x128xf32>
    %14 = arith.maximumf %12, %13 : vector<128x128xf32>
    %c0_13 = arith.constant 0 : index
    %c0_14 = arith.constant 0 : index
    %15 = vector.load %arg7[%c0_13, %c0_14] : memref<128x128xf32, #tpu.memory_space<vmem>>, vector<128x128xf32>
    tpu.vector_store %arg7[%c0_13, %c0_14], %14 {strides = array<i32>} : memref<128x128xf32, #tpu.memory_space<vmem>>, vector<128x128xf32>,
    return
  }
  func.func @transform_0(%arg0: i32) -> (i32, i32) {
    %c0_i32 = arith.constant 0 : i32
    %c0_i32_0 = arith.constant 0 : i32
    return %arg0, %c0_i32 : i32, i32
  }
  func.func @transform_1(%arg0: i32) -> (i32, i32) {
    %c0_i32 = arith.constant 0 : i32
    %c0_i32_0 = arith.constant 0 : i32
    %c0_i32_1 = arith.constant 0 : i32
    return %c0_i32, %c0_i32_0 : i32, i32
  }
  func.func @transform_2(%arg0: i32) -> (i32, i32) {
    %c0_i32 = arith.constant 0 : i32
    %c0_i32_0 = arith.constant 0 : i32
    %c0_i32_1 = arith.constant 0 : i32
    return %c0_i32, %c0_i32_0 : i32, i32
  }
  func.func @transform_3(%arg0: i32) -> (i32, i32) {
    %c0_i32 = arith.constant 0 : i32
    %c0_i32_0 = arith.constant 0 : i32
    return %arg0, %c0_i32 : i32, i32
  }
  func.func @transform_4(%arg0: i32) -> (i32, i32) {
    %c0_i32 = arith.constant 0 : i32
    %c0_i32_0 = arith.constant 0 : i32
    %c0_i32_1 = arith.constant 0 : i32
    return %c0_i32, %c0_i32_0 : i32, i32
  }
  func.func @transform_5(%arg0: i32) -> (i32, i32) {
    %c0_i32 = arith.constant 0 : i32
    %c0_i32_0 = arith.constant 0 : i32
    %c0_i32_1 = arith.constant 0 : i32
    return %c0_i32, %c0_i32_0 : i32, i32
  }
  func.func @transform_6(%arg0: i32) -> (i32, i32) {
    %c0_i32 = arith.constant 0 : i32
    %c0_i32_0 = arith.constant 0 : i32
    return %arg0, %c0_i32 : i32, i32
  }
}

</mosaic_0001>

<llo_original>
// kernel: basic_block_forward.2
$region0: #{basic_block_forward.2}
  #allocation0 [shape = 'u32[]', space=smem, size = 0x4, offset = 0x4, fixed_abs, tag = 'smem constant byte address 0x4 - core index']
  #allocation1 [shape = 'u32[144,128]{1,0:T(1,128)}', space=vmem, size = 0x12000, scoped, tag = 'internal scratch']
  %s0 = inlined_call_operand.vmem [shape: bf16[128,128], index: 0, kind: input, shape index: {}]
  %s1 = inlined_call_operand.vmem [shape: bf16[128,128], index: 1, kind: input, shape index: {}]
  %s2 = inlined_call_operand.vmem [shape: f32[1,128], index: 2, kind: input, shape index: {}]
  %s3 = inlined_call_operand.vmem [shape: bf16[128,128], index: 3, kind: output, shape index: {}]
  %s4 = sld [smem:[#allocation0]]
  $region22: #{basic_block_forward.2} parent=0
    _
  %s6 = ssub.s32 1, %s4
  %s7 = scalar_select 0, %s6, %s4
  // Predicated region
  $region2: #{basic_block_forward.2} parent=0 // pred_check
    _
  $region3: #{basic_block_forward.2} parent=0 // pred_check_branch
    %9 = sbr.rel (0) target = $region5
  $region4: #{basic_block_forward.2} parent=0 // pred_region
    _
  $region5: #{basic_block_forward.2} parent=0 // pred_fallthru
    _
  // Predicated region
  $region6: #{basic_block_forward.2} parent=0 // pred_check
    _
  $region7: #{basic_block_forward.2} parent=0 // pred_check_branch
    %11 = sbr.rel (0) target = $region9
  $region8: #{basic_block_forward.2} parent=0 // pred_region
    _
  $region9: #{basic_block_forward.2} parent=0 // pred_fallthru
    _
  // Predicated region
  $region10: #{basic_block_forward.2} parent=0 // pred_check
    _
  $region11: #{basic_block_forward.2} parent=0 // pred_check_branch
    %13 = sbr.rel (0) target = $region13
  $region12: #{basic_block_forward.2} parent=0 // pred_region
    _
  $region13: #{basic_block_forward.2} parent=0 // pred_fallthru
    _
  %v15 = vld [vmem:[%s0] sm:$0xf]
  %v16 = vld [vmem:[%s0 + $0x4] sm:$0xf]
  %v17 = vld [vmem:[%s0 + $0x8] sm:$0xf]
  %v18 = vld [vmem:[%s0 + $0xc] sm:$0xf]
  %v19 = vld [vmem:[%s0 + $0x10] sm:$0xf]
  %v20 = vld [vmem:[%s0 + $0x14] sm:$0xf]
  %v21 = vld [vmem:[%s0 + $0x18] sm:$0xf]
  %v22 = vld [vmem:[%s0 + $0x1c] sm:$0xf]
  %v23 = vld [vmem:[%s0 + $0x20] sm:$0xf]
  %v24 = vld [vmem:[%s0 + $0x24] sm:$0xf]
  %v25 = vld [vmem:[%s0 + $0x28] sm:$0xf]
  %v26 = vld [vmem:[%s0 + $0x2c] sm:$0xf]
  %v27 = vld [vmem:[%s0 + $0x30] sm:$0xf]
  %v28 = vld [vmem:[%s0 + $0x34] sm:$0xf]
  %v29 = vld [vmem:[%s0 + $0x38] sm:$0xf]
  %v30 = vld [vmem:[%s0 + $0x3c] sm:$0xf]
  %v31 = vld [vmem:[%s1] sm:$0xf]
  %v32 = vld [vmem:[%s1 + $0x4] sm:$0xf]
  %v33 = vld [vmem:[%s1 + $0x8] sm:$0xf]
  %v34 = vld [vmem:[%s1 + $0xc] sm:$0xf]
  %v35 = vld [vmem:[%s1 + $0x10] sm:$0xf]
  %v36 = vld [vmem:[%s1 + $0x14] sm:$0xf]
  %v37 = vld [vmem:[%s1 + $0x18] sm:$0xf]
  %v38 = vld [vmem:[%s1 + $0x1c] sm:$0xf]
  %v39 = vld [vmem:[%s1 + $0x20] sm:$0xf]
  %v40 = vld [vmem:[%s1 + $0x24] sm:$0xf]
  %v41 = vld [vmem:[%s1 + $0x28] sm:$0xf]
  %v42 = vld [vmem:[%s1 + $0x2c] sm:$0xf]
  %v43 = vld [vmem:[%s1 + $0x30] sm:$0xf]
  %v44 = vld [vmem:[%s1 + $0x34] sm:$0xf]
  %v45 = vld [vmem:[%s1 + $0x38] sm:$0xf]
  %v46 = vld [vmem:[%s1 + $0x3c] sm:$0xf]
  %v47 = vld [vmem:[%s2] sm:$0x1]
  %v49 = vlaneseq
  %v50 = vshrl.u32 %v49, 7
  %v51 = vsub.s32 0, %v50
  %v52 = vrot.slane %v47, %v51
  %v70 = vunpack.c.l.b16 %v15
  %v71 = vunpack.c.l.b16 %v16
  %v72 = vunpack.c.l.b16 %v17
  %v73 = vunpack.c.l.b16 %v18
  %v74 = vunpack.c.l.b16 %v19
  %v75 = vunpack.c.l.b16 %v20
  %v76 = vunpack.c.l.b16 %v21
  %v77 = vunpack.c.l.b16 %v22
  %v78 = vunpack.c.l.b16 %v23
  %v79 = vunpack.c.l.b16 %v24
  %v80 = vunpack.c.l.b16 %v25
  %v81 = vunpack.c.l.b16 %v26
  %v82 = vunpack.c.l.b16 %v27
  %v83 = vunpack.c.l.b16 %v28
  %v84 = vunpack.c.l.b16 %v29
  %v85 = vunpack.c.l.b16 %v30
  %v86 = vpack.c.b16 %v71, %v70
  %v87 = vpack.c.b16 %v73, %v72
  %v88 = vpack.c.b16 %v75, %v74
  %v89 = vpack.c.b16 %v77, %v76
  %v90 = vpack.c.b16 %v79, %v78
  %v91 = vpack.c.b16 %v81, %v80
  %v92 = vpack.c.b16 %v83, %v82
  %v93 = vpack.c.b16 %v85, %v84
  %v118 = vunpack.c.l.b16 %v31
  %v119 = vunpack.c.l.b16 %v32
  %v120 = vunpack.c.l.b16 %v33
  %v121 = vunpack.c.l.b16 %v34
  %v122 = vunpack.c.l.b16 %v35
  %v123 = vunpack.c.l.b16 %v36
  %v124 = vunpack.c.l.b16 %v37
  %v125 = vunpack.c.l.b16 %v38
  %v126 = vunpack.c.l.b16 %v39
  %v127 = vunpack.c.l.b16 %v40
  %v128 = vunpack.c.l.b16 %v41
  %v129 = vunpack.c.l.b16 %v42
  %v130 = vunpack.c.l.b16 %v43
  %v131 = vunpack.c.l.b16 %v44
  %v132 = vunpack.c.l.b16 %v45
  %v133 = vunpack.c.l.b16 %v46
  %v134 = vpack.c.b16 %v119, %v118
  %v135 = vpack.c.b16 %v121, %v120
  %v136 = vpack.c.b16 %v123, %v122
  %v137 = vpack.c.b16 %v125, %v124
  %v138 = vpack.c.b16 %v127, %v126
  %v139 = vpack.c.b16 %v129, %v128
  %v140 = vpack.c.b16 %v131, %v130
  %v141 = vpack.c.b16 %v133, %v132
  %150 = vmatprep.subr.bf16.mxu0 0
  %151 = vmatpush1.bf16.msra.mxu0 %v134
  %152 = vmatprep.subr.bf16.mxu0 0
  %153 = vmatpush1.bf16.msra.mxu0 %v135
  %154 = vmatprep.subr.bf16.mxu0 0
  %155 = vmatpush1.bf16.msra.mxu0 %v136
  %156 = vmatprep.subr.bf16.mxu0 0
  %157 = vmatpush1.bf16.msra.mxu0 %v137
  %158 = vmatprep.subr.bf16.mxu0 0
  %159 = vmatpush1.bf16.msra.mxu0 %v138
  %160 = vmatprep.subr.bf16.mxu0 0
  %161 = vmatpush1.bf16.msra.mxu0 %v139
  %162 = vmatprep.subr.bf16.mxu0 0
  %163 = vmatpush1.bf16.msra.mxu0 %v140
  %164 = vmatprep.subr.bf16.mxu0 0
  %165 = vmatpush1.bf16.msra.mxu0 %v141
  %166 = vmatprep.subr.bf16.mxu0 0
  %167 = vmatpush1.bf16.msra.mxu0 0
  %168 = vmatprep.subr.bf16.mxu0 0
  %169 = vmatpush1.bf16.msra.mxu0 0
  %170 = vmatprep.subr.bf16.mxu0 0
  %171 = vmatpush1.bf16.msra.mxu0 0
  %172 = vmatprep.subr.bf16.mxu0 0
  %173 = vmatpush1.bf16.msra.mxu0 0
  %174 = vmatprep.subr.bf16.mxu0 0
  %175 = vmatpush1.bf16.msra.mxu0 0
  %176 = vmatprep.subr.bf16.mxu0 0
  %177 = vmatpush1.bf16.msra.mxu0 0
  %178 = vmatprep.subr.bf16.mxu0 0
  %179 = vmatpush1.bf16.msra.mxu0 0
  %180 = vmatprep.subr.bf16.mxu0 0
  %181 = vmatpush1.bf16.msra.mxu0 0
  %182 = vmatprep.mubr.bf16.mxu0 0
  %183 = vmatmul.mubr.bf16.gmra.mrb[0].mxu0 %v86
  %v184 = vpop.f32.mrb[0].mxu0
  %v185 = vadd.f32 %v52, %v184
  %v186 = vpop.f32.mrb[0].mxu0
  %v187 = vpop.f32.mrb[0].mxu0
  %v188 = vadd.f32 %v52, %v187
  %v189 = vpop.f32.mrb[0].mxu0
  %190 = vmatprep.mubr.bf16.mxu0 0
  %191 = vmatmul.mubr.bf16.gmra.mrb[0].mxu0 %v87
  %v192 = vpop.f32.mrb[0].mxu0
  %v193 = vadd.f32 %v52, %v192
  %v194 = vpop.f32.mrb[0].mxu0
  %v195 = vpop.f32.mrb[0].mxu0
  %v196 = vadd.f32 %v52, %v195
  %v197 = vpop.f32.mrb[0].mxu0
  %198 = vmatprep.mubr.bf16.mxu0 0
  %199 = vmatmul.mubr.bf16.gmra.mrb[0].mxu0 %v88
  %v200 = vpop.f32.mrb[0].mxu0
  %v201 = vadd.f32 %v52, %v200
  %v202 = vpop.f32.mrb[0].mxu0
  %v203 = vpop.f32.mrb[0].mxu0
  %v204 = vadd.f32 %v52, %v203
  %v205 = vpop.f32.mrb[0].mxu0
  %206 = vmatprep.mubr.bf16.mxu0 0
  %207 = vmatmul.mubr.bf16.gmra.mrb[0].mxu0 %v89
  %v208 = vpop.f32.mrb[0].mxu0
  %v209 = vadd.f32 %v52, %v208
  %v210 = vpop.f32.mrb[0].mxu0
  %v211 = vpop.f32.mrb[0].mxu0
  %v212 = vadd.f32 %v52, %v211
  %v213 = vpop.f32.mrb[0].mxu0
  %214 = vmatprep.mubr.bf16.mxu0 0
  %215 = vmatmul.mubr.bf16.gmra.mrb[0].mxu0 %v90
  %v216 = vpop.f32.mrb[0].mxu0
  %v217 = vadd.f32 %v52, %v216
  %v218 = vpop.f32.mrb[0].mxu0
  %v219 = vpop.f32.mrb[0].mxu0
  %v220 = vadd.f32 %v52, %v219
  %v221 = vpop.f32.mrb[0].mxu0
  %222 = vmatprep.mubr.bf16.mxu0 0
  %223 = vmatmul.mubr.bf16.gmra.mrb[0].mxu0 %v91
  %v224 = vpop.f32.mrb[0].mxu0
  %v225 = vadd.f32 %v52, %v224
  %v226 = vpop.f32.mrb[0].mxu0
  %v227 = vpop.f32.mrb[0].mxu0
  %v228 = vadd.f32 %v52, %v227
  %v229 = vpop.f32.mrb[0].mxu0
  %230 = vmatprep.mubr.bf16.mxu0 0
  %231 = vmatmul.mubr.bf16.gmra.mrb[0].mxu0 %v92
  %v232 = vpop.f32.mrb[0].mxu0
  %v233 = vadd.f32 %v52, %v232
  %v234 = vpop.f32.mrb[0].mxu0
  %v235 = vpop.f32.mrb[0].mxu0
  %v236 = vadd.f32 %v52, %v235
  %v237 = vpop.f32.mrb[0].mxu0
  %238 = vmatprep.mubr.bf16.mxu0 0
  %239 = vmatmul.mubr.bf16.gmra.mrb[0].mxu0 %v93
  %v240 = vpop.f32.mrb[0].mxu0
  %v241 = vadd.f32 %v52, %v240
  %v242 = vpop.f32.mrb[0].mxu0
  %v243 = vpop.f32.mrb[0].mxu0
  %v244 = vadd.f32 %v52, %v243
  %v245 = vpop.f32.mrb[0].mxu0
  %246 = vdwg.mxu0
  %v247 = vmax.f32 %v185, 0.0
  %v248 = vmax.f32 %v188, 0.0
  %v249 = vmax.f32 %v193, 0.0
  %v250 = vmax.f32 %v196, 0.0
  %v251 = vmax.f32 %v201, 0.0
  %v252 = vmax.f32 %v204, 0.0
  %v253 = vmax.f32 %v209, 0.0
  %v254 = vmax.f32 %v212, 0.0
  %v255 = vmax.f32 %v217, 0.0
  %v256 = vmax.f32 %v220, 0.0
  %v257 = vmax.f32 %v225, 0.0
  %v258 = vmax.f32 %v228, 0.0
  %v259 = vmax.f32 %v233, 0.0
  %v260 = vmax.f32 %v236, 0.0
  %v261 = vmax.f32 %v241, 0.0
  %v262 = vmax.f32 %v244, 0.0
  %v263 = vpack.c.bf16 %v248, %v247
  %v264 = vpack.c.bf16 %v250, %v249
  %v265 = vpack.c.bf16 %v252, %v251
  %v266 = vpack.c.bf16 %v254, %v253
  %v267 = vpack.c.bf16 %v256, %v255
  %v268 = vpack.c.bf16 %v258, %v257
  %v269 = vpack.c.bf16 %v260, %v259
  %v270 = vpack.c.bf16 %v262, %v261
  %v279 = vunpack.c.l.b16 %v263
  %v280 = vunpack.c.h.b16 %v263
  %v281 = vunpack.c.l.b16 %v264
  %v282 = vunpack.c.h.b16 %v264
  %v283 = vunpack.c.l.b16 %v265
  %v284 = vunpack.c.h.b16 %v265
  %v285 = vunpack.c.l.b16 %v266
  %v286 = vunpack.c.h.b16 %v266
  %v287 = vunpack.c.l.b16 %v267
  %v288 = vunpack.c.h.b16 %v267
  %v289 = vunpack.c.l.b16 %v268
  %v290 = vunpack.c.h.b16 %v268
  %v291 = vunpack.c.l.b16 %v269
  %v292 = vunpack.c.h.b16 %v269
  %v293 = vunpack.c.l.b16 %v270
  %v294 = vunpack.c.h.b16 %v270
  %v295 = vpack.c.b16 %v279, %v279
  %v296 = vpack.c.b16 %v280, %v280
  %v297 = vpack.c.b16 %v281, %v281
  %v298 = vpack.c.b16 %v282, %v282
  %v299 = vpack.c.b16 %v283, %v283
  %v300 = vpack.c.b16 %v284, %v284
  %v301 = vpack.c.b16 %v285, %v285
  %v302 = vpack.c.b16 %v286, %v286
  %v303 = vpack.c.b16 %v287, %v287
  %v304 = vpack.c.b16 %v288, %v288
  %v305 = vpack.c.b16 %v289, %v289
  %v306 = vpack.c.b16 %v290, %v290
  %v307 = vpack.c.b16 %v291, %v291
  %v308 = vpack.c.b16 %v292, %v292
  %v309 = vpack.c.b16 %v293, %v293
  %v310 = vpack.c.b16 %v294, %v294
  %327 = vst [vmem:[%s3] sm:$0xf] %v295
  %328 = vst [vmem:[%s3 + $0x4] sm:$0xf] %v296
  %329 = vst [vmem:[%s3 + $0x8] sm:$0xf] %v297
  %330 = vst [vmem:[%s3 + $0xc] sm:$0xf] %v298
  %331 = vst [vmem:[%s3 + $0x10] sm:$0xf] %v299
  %332 = vst [vmem:[%s3 + $0x14] sm:$0xf] %v300
  %333 = vst [vmem:[%s3 + $0x18] sm:$0xf] %v301
  %334 = vst [vmem:[%s3 + $0x1c] sm:$0xf] %v302
  %335 = vst [vmem:[%s3 + $0x20] sm:$0xf] %v303
  %336 = vst [vmem:[%s3 + $0x24] sm:$0xf] %v304
  %337 = vst [vmem:[%s3 + $0x28] sm:$0xf] %v305
  %338 = vst [vmem:[%s3 + $0x2c] sm:$0xf] %v306
  %339 = vst [vmem:[%s3 + $0x30] sm:$0xf] %v307
  %340 = vst [vmem:[%s3 + $0x34] sm:$0xf] %v308
  %341 = vst [vmem:[%s3 + $0x38] sm:$0xf] %v309
  %342 = vst [vmem:[%s3 + $0x3c] sm:$0xf] %v310
  // Predicated region
  $region14: #{basic_block_forward.2} parent=0 // pred_check
    _
  $region15: #{basic_block_forward.2} parent=0 // pred_check_branch
    %344 = sbr.rel (0) target = $region17
  $region16: #{basic_block_forward.2} parent=0 // pred_region
    _
  $region17: #{basic_block_forward.2} parent=0 // pred_fallthru
    _
  // Predicated region
  $region18: #{basic_block_forward.2} parent=0 // pred_check
    _
  $region19: #{basic_block_forward.2} parent=0 // pred_check_branch
    %346 = sbr.rel (0) target = $region21
  $region20: #{basic_block_forward.2} parent=0 // pred_region
    _
  $region21: #{basic_block_forward.2} parent=0 // pred_fallthru
    _

// kernel: basic_block_forward.3
$region0: #{basic_block_forward.3}
  #allocation0 [shape = 'u32[]', space=smem, size = 0x4, offset = 0x4, fixed_abs, tag = 'smem constant byte address 0x4 - core index']
  #allocation1 [shape = 'u32[144,128]{1,0:T(1,128)}', space=vmem, size = 0x12000, scoped, tag = 'internal scratch']
  %s0 = inlined_call_operand.vmem [shape: bf16[128,128], index: 0, kind: input, shape index: {}]
  %s1 = inlined_call_operand.vmem [shape: bf16[128,128], index: 1, kind: input, shape index: {}]
  %s2 = inlined_call_operand.vmem [shape: f32[1,128], index: 2, kind: input, shape index: {}]
  %s3 = inlined_call_operand.vmem [shape: bf16[128,4], index: 3, kind: input, shape index: {}]
  %s4 = inlined_call_operand.vmem [shape: bf16[4,128], index: 4, kind: input, shape index: {}]
  %s5 = inlined_call_operand.vmem [shape: f32[1,128], index: 5, kind: input, shape index: {}]
  %s6 = inlined_call_operand.vmem [shape: f32[128,128], index: 6, kind: output, shape index: {}]
  %s7 = sld [smem:[#allocation0]]
  $region34: #{basic_block_forward.3} parent=0
    _
  %s9 = ssub.s32 1, %s7
  %s10 = scalar_select 0, %s9, %s7
  // Predicated region
  $region2: #{basic_block_forward.3} parent=0 // pred_check
    _
  $region3: #{basic_block_forward.3} parent=0 // pred_check_branch
    %12 = sbr.rel (0) target = $region5
  $region4: #{basic_block_forward.3} parent=0 // pred_region
    _
  $region5: #{basic_block_forward.3} parent=0 // pred_fallthru
    _
  // Predicated region
  $region6: #{basic_block_forward.3} parent=0 // pred_check
    _
  $region7: #{basic_block_forward.3} parent=0 // pred_check_branch
    %14 = sbr.rel (0) target = $region9
  $region8: #{basic_block_forward.3} parent=0 // pred_region
    _
  $region9: #{basic_block_forward.3} parent=0 // pred_fallthru
    _
  // Predicated region
  $region10: #{basic_block_forward.3} parent=0 // pred_check
    _
  $region11: #{basic_block_forward.3} parent=0 // pred_check_branch
    %16 = sbr.rel (0) target = $region13
  $region12: #{basic_block_forward.3} parent=0 // pred_region
    _
  $region13: #{basic_block_forward.3} parent=0 // pred_fallthru
    _
  // Predicated region
  $region14: #{basic_block_forward.3} parent=0 // pred_check
    _
  $region15: #{basic_block_forward.3} parent=0 // pred_check_branch
    %18 = sbr.rel (0) target = $region17
  $region16: #{basic_block_forward.3} parent=0 // pred_region
    _
  $region17: #{basic_block_forward.3} parent=0 // pred_fallthru
    _
  // Predicated region
  $region18: #{basic_block_forward.3} parent=0 // pred_check
    _
  $region19: #{basic_block_forward.3} parent=0 // pred_check_branch
    %20 = sbr.rel (0) target = $region21
  $region20: #{basic_block_forward.3} parent=0 // pred_region
    _
  $region21: #{basic_block_forward.3} parent=0 // pred_fallthru
    _
  // Predicated region
  $region22: #{basic_block_forward.3} parent=0 // pred_check
    _
  $region23: #{basic_block_forward.3} parent=0 // pred_check_branch
    %22 = sbr.rel (0) target = $region25
  $region24: #{basic_block_forward.3} parent=0 // pred_region
    _
  $region25: #{basic_block_forward.3} parent=0 // pred_fallthru
    _
  %v24 = vld [vmem:[%s0] sm:$0xf]
  %v25 = vld [vmem:[%s0 + $0x4] sm:$0xf]
  %v26 = vld [vmem:[%s0 + $0x8] sm:$0xf]
  %v27 = vld [vmem:[%s0 + $0xc] sm:$0xf]
  %v28 = vld [vmem:[%s0 + $0x10] sm:$0xf]
  %v29 = vld [vmem:[%s0 + $0x14] sm:$0xf]
  %v30 = vld [vmem:[%s0 + $0x18] sm:$0xf]
  %v31 = vld [vmem:[%s0 + $0x1c] sm:$0xf]
  %v32 = vld [vmem:[%s0 + $0x20] sm:$0xf]
  %v33 = vld [vmem:[%s0 + $0x24] sm:$0xf]
  %v34 = vld [vmem:[%s0 + $0x28] sm:$0xf]
  %v35 = vld [vmem:[%s0 + $0x2c] sm:$0xf]
  %v36 = vld [vmem:[%s0 + $0x30] sm:$0xf]
  %v37 = vld [vmem:[%s0 + $0x34] sm:$0xf]
  %v38 = vld [vmem:[%s0 + $0x38] sm:$0xf]
  %v39 = vld [vmem:[%s0 + $0x3c] sm:$0xf]
  %v40 = vld [vmem:[%s1] sm:$0xf]
  %v41 = vld [vmem:[%s1 + $0x4] sm:$0xf]
  %v42 = vld [vmem:[%s1 + $0x8] sm:$0xf]
  %v43 = vld [vmem:[%s1 + $0xc] sm:$0xf]
  %v44 = vld [vmem:[%s1 + $0x10] sm:$0xf]
  %v45 = vld [vmem:[%s1 + $0x14] sm:$0xf]
  %v46 = vld [vmem:[%s1 + $0x18] sm:$0xf]
  %v47 = vld [vmem:[%s1 + $0x1c] sm:$0xf]
  %v48 = vld [vmem:[%s1 + $0x20] sm:$0xf]
  %v49 = vld [vmem:[%s1 + $0x24] sm:$0xf]
  %v50 = vld [vmem:[%s1 + $0x28] sm:$0xf]
  %v51 = vld [vmem:[%s1 + $0x2c] sm:$0xf]
  %v52 = vld [vmem:[%s1 + $0x30] sm:$0xf]
  %v53 = vld [vmem:[%s1 + $0x34] sm:$0xf]
  %v54 = vld [vmem:[%s1 + $0x38] sm:$0xf]
  %v55 = vld [vmem:[%s1 + $0x3c] sm:$0xf]
  %v56 = vld [vmem:[%s3] sm:$0xf]
  %v57 = vld [vmem:[%s3 + $0x4] sm:$0xf]
  %v58 = vld [vmem:[%s3 + $0x8] sm:$0xf]
  %v59 = vld [vmem:[%s3 + $0xc] sm:$0xf]
  %v60 = vld [vmem:[%s3 + $0x10] sm:$0xf]
  %v61 = vld [vmem:[%s3 + $0x14] sm:$0xf]
  %v62 = vld [vmem:[%s3 + $0x18] sm:$0xf]
  %v63 = vld [vmem:[%s3 + $0x1c] sm:$0xf]
  %v64 = vld [vmem:[%s3 + $0x20] sm:$0xf]
  %v65 = vld [vmem:[%s3 + $0x24] sm:$0xf]
  %v66 = vld [vmem:[%s3 + $0x28] sm:$0xf]
  %v67 = vld [vmem:[%s3 + $0x2c] sm:$0xf]
  %v68 = vld [vmem:[%s3 + $0x30] sm:$0xf]
  %v69 = vld [vmem:[%s3 + $0x34] sm:$0xf]
  %v70 = vld [vmem:[%s3 + $0x38] sm:$0xf]
  %v71 = vld [vmem:[%s3 + $0x3c] sm:$0xf]
  %v72 = vld [vmem:[%s4] sm:$0x3]
  %v89 = vunpack.c.l.b16 %v56
  %v90 = vunpack.c.l.b16 %v57
  %v91 = vunpack.c.l.b16 %v58
  %v92 = vunpack.c.l.b16 %v59
  %v93 = vunpack.c.l.b16 %v60
  %v94 = vunpack.c.l.b16 %v61
  %v95 = vunpack.c.l.b16 %v62
  %v96 = vunpack.c.l.b16 %v63
  %v97 = vunpack.c.l.b16 %v64
  %v98 = vunpack.c.l.b16 %v65
  %v99 = vunpack.c.l.b16 %v66
  %v100 = vunpack.c.l.b16 %v67
  %v101 = vunpack.c.l.b16 %v68
  %v102 = vunpack.c.l.b16 %v69
  %v103 = vunpack.c.l.b16 %v70
  %v104 = vunpack.c.l.b16 %v71
  %v105 = vpack.c.b16 %v90, %v89
  %v106 = vpack.c.b16 %v92, %v91
  %v107 = vpack.c.b16 %v94, %v93
  %v108 = vpack.c.b16 %v96, %v95
  %v109 = vpack.c.b16 %v98, %v97
  %v110 = vpack.c.b16 %v100, %v99
  %v111 = vpack.c.b16 %v102, %v101
  %v112 = vpack.c.b16 %v104, %v103
  %vm113 = vcmask 31744
  %v115 = vsel %vm113, %v105, 0
  %v118 = vsel %vm113, %v106, 0
  %v121 = vsel %vm113, %v107, 0
  %v124 = vsel %vm113, %v108, 0
  %v127 = vsel %vm113, %v109, 0
  %v130 = vsel %vm113, %v110, 0
  %v133 = vsel %vm113, %v111, 0
  %v136 = vsel %vm113, %v112, 0
  %vm138 = vcmask 1041408
  %v140 = vsel %vm138, %v72, 0
  %142 = vmatprep.subr.bf16.mxu0 0
  %143 = vmatpush1.bf16.msra.mxu0 %v140
  %144 = vmatprep.subr.bf16.mxu0 0
  %145 = vmatpush1.bf16.msra.mxu0 0
  %146 = vmatprep.subr.bf16.mxu0 0
  %147 = vmatpush1.bf16.msra.mxu0 0
  %148 = vmatprep.subr.bf16.mxu0 0
  %149 = vmatpush1.bf16.msra.mxu0 0
  %150 = vmatprep.subr.bf16.mxu0 0
  %151 = vmatpush1.bf16.msra.mxu0 0
  %152 = vmatprep.subr.bf16.mxu0 0
  %153 = vmatpush1.bf16.msra.mxu0 0
  %154 = vmatprep.subr.bf16.mxu0 0
  %155 = vmatpush1.bf16.msra.mxu0 0
  %156 = vmatprep.subr.bf16.mxu0 0
  %157 = vmatpush1.bf16.msra.mxu0 0
  %158 = vmatprep.subr.bf16.mxu0 0
  %159 = vmatpush1.bf16.msra.mxu0 0
  %160 = vmatprep.subr.bf16.mxu0 0
  %161 = vmatpush1.bf16.msra.mxu0 0
  %162 = vmatprep.subr.bf16.mxu0 0
  %163 = vmatpush1.bf16.msra.mxu0 0
  %164 = vmatprep.subr.bf16.mxu0 0
  %165 = vmatpush1.bf16.msra.mxu0 0
  %166 = vmatprep.subr.bf16.mxu0 0
  %167 = vmatpush1.bf16.msra.mxu0 0
  %168 = vmatprep.subr.bf16.mxu0 0
  %169 = vmatpush1.bf16.msra.mxu0 0
  %170 = vmatprep.subr.bf16.mxu0 0
  %171 = vmatpush1.bf16.msra.mxu0 0
  %172 = vmatprep.subr.bf16.mxu0 0
  %173 = vmatpush1.bf16.msra.mxu0 0
  %174 = vmatprep.mubr.bf16.mxu0 0
  %175 = vmatmul.mubr.bf16.gmra.mrb[0].mxu0 %v115
  %v176 = vpop.f32.mrb[0].mxu0
  %v177 = vadd.f32 0.0, %v176
  %v178 = vpop.f32.mrb[0].mxu0
  %v179 = vpop.f32.mrb[0].mxu0
  %v180 = vadd.f32 0.0, %v179
  %v181 = vpop.f32.mrb[0].mxu0
  %182 = vmatprep.mubr.bf16.mxu0 0
  %183 = vmatmul.mubr.bf16.gmra.mrb[0].mxu0 %v118
  %v184 = vpop.f32.mrb[0].mxu0
  %v185 = vadd.f32 0.0, %v184
  %v186 = vpop.f32.mrb[0].mxu0
  %v187 = vpop.f32.mrb[0].mxu0
  %v188 = vadd.f32 0.0, %v187
  %v189 = vpop.f32.mrb[0].mxu0
  %190 = vmatprep.mubr.bf16.mxu0 0
  %191 = vmatmul.mubr.bf16.gmra.mrb[0].mxu0 %v121
  %v192 = vpop.f32.mrb[0].mxu0
  %v193 = vadd.f32 0.0, %v192
  %v194 = vpop.f32.mrb[0].mxu0
  %v195 = vpop.f32.mrb[0].mxu0
  %v196 = vadd.f32 0.0, %v195
  %v197 = vpop.f32.mrb[0].mxu0
  %198 = vmatprep.mubr.bf16.mxu0 0
  %199 = vmatmul.mubr.bf16.gmra.mrb[0].mxu0 %v124
  %v200 = vpop.f32.mrb[0].mxu0
  %v201 = vadd.f32 0.0, %v200
  %v202 = vpop.f32.mrb[0].mxu0
  %v203 = vpop.f32.mrb[0].mxu0
  %v204 = vadd.f32 0.0, %v203
  %v205 = vpop.f32.mrb[0].mxu0
  %206 = vmatprep.mubr.bf16.mxu0 0
  %207 = vmatmul.mubr.bf16.gmra.mrb[0].mxu0 %v127
  %v208 = vpop.f32.mrb[0].mxu0
  %v209 = vadd.f32 0.0, %v208
  %v210 = vpop.f32.mrb[0].mxu0
  %v211 = vpop.f32.mrb[0].mxu0
  %v212 = vadd.f32 0.0, %v211
  %v213 = vpop.f32.mrb[0].mxu0
  %214 = vmatprep.mubr.bf16.mxu0 0
  %215 = vmatmul.mubr.bf16.gmra.mrb[0].mxu0 %v130
  %v216 = vpop.f32.mrb[0].mxu0
  %v217 = vadd.f32 0.0, %v216
  %v218 = vpop.f32.mrb[0].mxu0
  %v219 = vpop.f32.mrb[0].mxu0
  %v220 = vadd.f32 0.0, %v219
  %v221 = vpop.f32.mrb[0].mxu0
  %222 = vmatprep.mubr.bf16.mxu0 0
  %223 = vmatmul.mubr.bf16.gmra.mrb[0].mxu0 %v133
  %v224 = vpop.f32.mrb[0].mxu0
  %v225 = vadd.f32 0.0, %v224
  %v226 = vpop.f32.mrb[0].mxu0
  %v227 = vpop.f32.mrb[0].mxu0
  %v228 = vadd.f32 0.0, %v227
  %v229 = vpop.f32.mrb[0].mxu0
  %230 = vmatprep.mubr.bf16.mxu0 0
  %231 = vmatmul.mubr.bf16.gmra.mrb[0].mxu0 %v136
  %v232 = vpop.f32.mrb[0].mxu0
  %v233 = vadd.f32 0.0, %v232
  %v234 = vpop.f32.mrb[0].mxu0
  %v235 = vpop.f32.mrb[0].mxu0
  %v236 = vadd.f32 0.0, %v235
  %v237 = vpop.f32.mrb[0].mxu0
  %238 = vdwg.mxu0
  %v239 = vld [vmem:[%s2] sm:$0x1]
  %v241 = vlaneseq
  %v242 = vshrl.u32 %v241, 7
  %v243 = vsub.s32 0, %v242
  %v244 = vrot.slane %v239, %v243
  %v262 = vunpack.c.l.b16 %v24
  %v263 = vunpack.c.l.b16 %v25
  %v264 = vunpack.c.l.b16 %v26
  %v265 = vunpack.c.l.b16 %v27
  %v266 = vunpack.c.l.b16 %v28
  %v267 = vunpack.c.l.b16 %v29
  %v268 = vunpack.c.l.b16 %v30
  %v269 = vunpack.c.l.b16 %v31
  %v270 = vunpack.c.l.b16 %v32
  %v271 = vunpack.c.l.b16 %v33
  %v272 = vunpack.c.l.b16 %v34
  %v273 = vunpack.c.l.b16 %v35
  %v274 = vunpack.c.l.b16 %v36
  %v275 = vunpack.c.l.b16 %v37
  %v276 = vunpack.c.l.b16 %v38
  %v277 = vunpack.c.l.b16 %v39
  %v278 = vpack.c.b16 %v263, %v262
  %v279 = vpack.c.b16 %v265, %v264
  %v280 = vpack.c.b16 %v267, %v266
  %v281 = vpack.c.b16 %v269, %v268
  %v282 = vpack.c.b16 %v271, %v270
  %v283 = vpack.c.b16 %v273, %v272
  %v284 = vpack.c.b16 %v275, %v274
  %v285 = vpack.c.b16 %v277, %v276
  %v310 = vunpack.c.l.b16 %v40
  %v311 = vunpack.c.l.b16 %v41
  %v312 = vunpack.c.l.b16 %v42
  %v313 = vunpack.c.l.b16 %v43
  %v314 = vunpack.c.l.b16 %v44
  %v315 = vunpack.c.l.b16 %v45
  %v316 = vunpack.c.l.b16 %v46
  %v317 = vunpack.c.l.b16 %v47
  %v318 = vunpack.c.l.b16 %v48
  %v319 = vunpack.c.l.b16 %v49
  %v320 = vunpack.c.l.b16 %v50
  %v321 = vunpack.c.l.b16 %v51
  %v322 = vunpack.c.l.b16 %v52
  %v323 = vunpack.c.l.b16 %v53
  %v324 = vunpack.c.l.b16 %v54
  %v325 = vunpack.c.l.b16 %v55
  %v326 = vpack.c.b16 %v311, %v310
  %v327 = vpack.c.b16 %v313, %v312
  %v328 = vpack.c.b16 %v315, %v314
  %v329 = vpack.c.b16 %v317, %v316
  %v330 = vpack.c.b16 %v319, %v318
  %v331 = vpack.c.b16 %v321, %v320
  %v332 = vpack.c.b16 %v323, %v322
  %v333 = vpack.c.b16 %v325, %v324
  %342 = vmatprep.subr.bf16.mxu0 0
  %343 = vmatpush1.bf16.msra.mxu0 %v326
  %344 = vmatprep.subr.bf16.mxu0 0
  %345 = vmatpush1.bf16.msra.mxu0 %v327
  %346 = vmatprep.subr.bf16.mxu0 0
  %347 = vmatpush1.bf16.msra.mxu0 %v328
  %348 = vmatprep.subr.bf16.mxu0 0
  %349 = vmatpush1.bf16.msra.mxu0 %v329
  %350 = vmatprep.subr.bf16.mxu0 0
  %351 = vmatpush1.bf16.msra.mxu0 %v330
  %352 = vmatprep.subr.bf16.mxu0 0
  %353 = vmatpush1.bf16.msra.mxu0 %v331
  %354 = vmatprep.subr.bf16.mxu0 0
  %355 = vmatpush1.bf16.msra.mxu0 %v332
  %356 = vmatprep.subr.bf16.mxu0 0
  %357 = vmatpush1.bf16.msra.mxu0 %v333
  %358 = vmatprep.subr.bf16.mxu0 0
  %359 = vmatpush1.bf16.msra.mxu0 0
  %360 = vmatprep.subr.bf16.mxu0 0
  %361 = vmatpush1.bf16.msra.mxu0 0
  %362 = vmatprep.subr.bf16.mxu0 0
  %363 = vmatpush1.bf16.msra.mxu0 0
  %364 = vmatprep.subr.bf16.mxu0 0
  %365 = vmatpush1.bf16.msra.mxu0 0
  %366 = vmatprep.subr.bf16.mxu0 0
  %367 = vmatpush1.bf16.msra.mxu0 0
  %368 = vmatprep.subr.bf16.mxu0 0
  %369 = vmatpush1.bf16.msra.mxu0 0
  %370 = vmatprep.subr.bf16.mxu0 0
  %371 = vmatpush1.bf16.msra.mxu0 0
  %372 = vmatprep.subr.bf16.mxu0 0
  %373 = vmatpush1.bf16.msra.mxu0 0
  %374 = vmatprep.mubr.bf16.mxu0 0
  %375 = vmatmul.mubr.bf16.gmra.mrb[0].mxu0 %v278
  %v376 = vpop.f32.mrb[0].mxu0
  %v377 = vadd.f32 %v244, %v376
  %v378 = vpop.f32.mrb[0].mxu0
  %v379 = vpop.f32.mrb[0].mxu0
  %v380 = vadd.f32 %v244, %v379
  %v381 = vpop.f32.mrb[0].mxu0
  %382 = vmatprep.mubr.bf16.mxu0 0
  %383 = vmatmul.mubr.bf16.gmra.mrb[0].mxu0 %v279
  %v384 = vpop.f32.mrb[0].mxu0
  %v385 = vadd.f32 %v244, %v384
  %v386 = vpop.f32.mrb[0].mxu0
  %v387 = vpop.f32.mrb[0].mxu0
  %v388 = vadd.f32 %v244, %v387
  %v389 = vpop.f32.mrb[0].mxu0
  %390 = vmatprep.mubr.bf16.mxu0 0
  %391 = vmatmul.mubr.bf16.gmra.mrb[0].mxu0 %v280
  %v392 = vpop.f32.mrb[0].mxu0
  %v393 = vadd.f32 %v244, %v392
  %v394 = vpop.f32.mrb[0].mxu0
  %v395 = vpop.f32.mrb[0].mxu0
  %v396 = vadd.f32 %v244, %v395
  %v397 = vpop.f32.mrb[0].mxu0
  %398 = vmatprep.mubr.bf16.mxu0 0
  %399 = vmatmul.mubr.bf16.gmra.mrb[0].mxu0 %v281
  %v400 = vpop.f32.mrb[0].mxu0
  %v401 = vadd.f32 %v244, %v400
  %v402 = vpop.f32.mrb[0].mxu0
  %v403 = vpop.f32.mrb[0].mxu0
  %v404 = vadd.f32 %v244, %v403
  %v405 = vpop.f32.mrb[0].mxu0
  %406 = vmatprep.mubr.bf16.mxu0 0
  %407 = vmatmul.mubr.bf16.gmra.mrb[0].mxu0 %v282
  %v408 = vpop.f32.mrb[0].mxu0
  %v409 = vadd.f32 %v244, %v408
  %v410 = vpop.f32.mrb[0].mxu0
  %v411 = vpop.f32.mrb[0].mxu0
  %v412 = vadd.f32 %v244, %v411
  %v413 = vpop.f32.mrb[0].mxu0
  %414 = vmatprep.mubr.bf16.mxu0 0
  %415 = vmatmul.mubr.bf16.gmra.mrb[0].mxu0 %v283
  %v416 = vpop.f32.mrb[0].mxu0
  %v417 = vadd.f32 %v244, %v416
  %v418 = vpop.f32.mrb[0].mxu0
  %v419 = vpop.f32.mrb[0].mxu0
  %v420 = vadd.f32 %v244, %v419
  %v421 = vpop.f32.mrb[0].mxu0
  %422 = vmatprep.mubr.bf16.mxu0 0
  %423 = vmatmul.mubr.bf16.gmra.mrb[0].mxu0 %v284
  %v424 = vpop.f32.mrb[0].mxu0
  %v425 = vadd.f32 %v244, %v424
  %v426 = vpop.f32.mrb[0].mxu0
  %v427 = vpop.f32.mrb[0].mxu0
  %v428 = vadd.f32 %v244, %v427
  %v429 = vpop.f32.mrb[0].mxu0
  %430 = vmatprep.mubr.bf16.mxu0 0
  %431 = vmatmul.mubr.bf16.gmra.mrb[0].mxu0 %v285
  %v432 = vpop.f32.mrb[0].mxu0
  %v433 = vadd.f32 %v244, %v432
  %v434 = vpop.f32.mrb[0].mxu0
  %v435 = vpop.f32.mrb[0].mxu0
  %v436 = vadd.f32 %v244, %v435
  %v437 = vpop.f32.mrb[0].mxu0
  %438 = vdwg.mxu0
  %v439 = vadd.f32 %v377, %v177
  %v440 = vadd.f32 %v380, %v180
  %v441 = vadd.f32 %v385, %v185
  %v442 = vadd.f32 %v388, %v188
  %v443 = vadd.f32 %v393, %v193
  %v444 = vadd.f32 %v396, %v196
  %v445 = vadd.f32 %v401, %v201
  %v446 = vadd.f32 %v404, %v204
  %v447 = vadd.f32 %v409, %v209
  %v448 = vadd.f32 %v412, %v212
  %v449 = vadd.f32 %v417, %v217
  %v450 = vadd.f32 %v420, %v220
  %v451 = vadd.f32 %v425, %v225
  %v452 = vadd.f32 %v428, %v228
  %v453 = vadd.f32 %v433, %v233
  %v454 = vadd.f32 %v436, %v236
  %v455 = vld [vmem:[%s5] sm:$0x1]
  %v457 = vlaneseq
  %v458 = vshrl.u32 %v457, 7
  %v459 = vsub.s32 0, %v458
  %v460 = vrot.slane %v455, %v459
  %v462 = vadd.f32 %v439, %v460
  %v463 = vadd.f32 %v440, %v460
  %v464 = vadd.f32 %v441, %v460
  %v465 = vadd.f32 %v442, %v460
  %v466 = vadd.f32 %v443, %v460
  %v467 = vadd.f32 %v444, %v460
  %v468 = vadd.f32 %v445, %v460
  %v469 = vadd.f32 %v446, %v460
  %v470 = vadd.f32 %v447, %v460
  %v471 = vadd.f32 %v448, %v460
  %v472 = vadd.f32 %v449, %v460
  %v473 = vadd.f32 %v450, %v460
  %v474 = vadd.f32 %v451, %v460
  %v475 = vadd.f32 %v452, %v460
  %v476 = vadd.f32 %v453, %v460
  %v477 = vadd.f32 %v454, %v460
  %v478 = vmax.f32 %v462, 0.0
  %v479 = vmax.f32 %v463, 0.0
  %v480 = vmax.f32 %v464, 0.0
  %v481 = vmax.f32 %v465, 0.0
  %v482 = vmax.f32 %v466, 0.0
  %v483 = vmax.f32 %v467, 0.0
  %v484 = vmax.f32 %v468, 0.0
  %v485 = vmax.f32 %v469, 0.0
  %v486 = vmax.f32 %v470, 0.0
  %v487 = vmax.f32 %v471, 0.0
  %v488 = vmax.f32 %v472, 0.0
  %v489 = vmax.f32 %v473, 0.0
  %v490 = vmax.f32 %v474, 0.0
  %v491 = vmax.f32 %v475, 0.0
  %v492 = vmax.f32 %v476, 0.0
  %v493 = vmax.f32 %v477, 0.0
  %494 = vst [vmem:[%s6] sm:$0xff] %v478
  %495 = vst [vmem:[%s6 + $0x8] sm:$0xff] %v479
  %496 = vst [vmem:[%s6 + $0x10] sm:$0xff] %v480
  %497 = vst [vmem:[%s6 + $0x18] sm:$0xff] %v481
  %498 = vst [vmem:[%s6 + $0x20] sm:$0xff] %v482
  %499 = vst [vmem:[%s6 + $0x28] sm:$0xff] %v483
  %500 = vst [vmem:[%s6 + $0x30] sm:$0xff] %v484
  %501 = vst [vmem:[%s6 + $0x38] sm:$0xff] %v485
  %502 = vst [vmem:[%s6 + $0x40] sm:$0xff] %v486
  %503 = vst [vmem:[%s6 + $0x48] sm:$0xff] %v487
  %504 = vst [vmem:[%s6 + $0x50] sm:$0xff] %v488
  %505 = vst [vmem:[%s6 + $0x58] sm:$0xff] %v489
  %506 = vst [vmem:[%s6 + $0x60] sm:$0xff] %v490
  %507 = vst [vmem:[%s6 + $0x68] sm:$0xff] %v491
  %508 = vst [vmem:[%s6 + $0x70] sm:$0xff] %v492
  %509 = vst [vmem:[%s6 + $0x78] sm:$0xff] %v493
  // Predicated region
  $region26: #{basic_block_forward.3} parent=0 // pred_check
    _
  $region27: #{basic_block_forward.3} parent=0 // pred_check_branch
    %511 = sbr.rel (0) target = $region29
  $region28: #{basic_block_forward.3} parent=0 // pred_region
    _
  $region29: #{basic_block_forward.3} parent=0 // pred_fallthru
    _
  // Predicated region
  $region30: #{basic_block_forward.3} parent=0 // pred_check
    _
  $region31: #{basic_block_forward.3} parent=0 // pred_check_branch
    %513 = sbr.rel (0) target = $region33
  $region32: #{basic_block_forward.3} parent=0 // pred_region
    _
  $region33: #{basic_block_forward.3} parent=0 // pred_fallthru
    _

</llo_original>
